<compile_context>
chip_gen: v5e
topology: v5e:2x2
jax: 0.10.0
libtpu: 0.0.40
codegen_flags: <defaults>
</compile_context>

<pallas_src>
import jax
import jax.numpy as jnp
from jax.experimental import pallas as pl
from jax.experimental.pallas import tpu as pltpu

STATE_DIM = 2      # env.observation_space.shape[0] for MountainCarContinuous-v0
HIDDEN_DIM = 100
OUT_DIM = 1

PAD_H = 128                       # hidden dim padded to one lane tile
P_ROWS = 8                        # packed-param sublane rows (>= STATE_DIM + 3)
_ROW_B1 = STATE_DIM               # packed row holding b1
_ROW_W2 = STATE_DIM + 1           # packed row holding w2[:, 0]
_ROW_B2 = STATE_DIM + 2           # packed row holding b2 (lane 0)

SINGLE_STEP_MAX = 1024            # single grid step up to this many (padded) rows
LARGE_TB = 512                    # block size for large (training-sized) batches

assert STATE_DIM + 3 <= P_ROWS


def _round_up(x, m):
    return ((x + m - 1) // m) * m


def _critic_kernel(x_ref, p_ref, o_ref):
    """One batch tile: relu(x @ W1 + b1) @ w2 + b2, entirely on VPU/XLU, narrow output."""
    p = p_ref[...]                                      # [P_ROWS, PAD_H]

    # Layer 1 as STATE_DIM broadcast FMAs (K=2 -> no MXU, no zero-padded contraction).
    # Read state columns straight from the ref: no lane-sparse [TB, 2] kept live.
    h = p[_ROW_B1:_ROW_B1 + 1, :]                       # [1, PAD_H] bias row
    for d in range(STATE_DIM):                          # static unroll (2 iters)
        h = h + x_ref[:, d:d + 1] * p[d:d + 1, :]       # [TB, PAD_H]
    h = jnp.maximum(h, 0.0)                             # ReLU (VPU); padded lanes stay 0

    # Layer 2 (100 -> 1): VPU multiply + cross-lane (XLU) reduce, then a narrow b2 add.
    v = jnp.sum(h * p[_ROW_W2:_ROW_W2 + 1, :], axis=-1, keepdims=True)   # [TB, 1]
    o_ref[...] = v + p[_ROW_B2:_ROW_B2 + 1, 0:1]        # [TB, 1] narrow store


def prepare_params(w1, b1, w2, b2):
    """Pack + zero-pad all weights/biases ONCE into a single (8, 128) f32 tile.

    Rows: 0..STATE_DIM-1 = W1 rows ([in, out] layout), STATE_DIM = b1,
    STATE_DIM+1 = w2[:, 0], STATE_DIM+2 = b2 in lane 0.
    Call this once outside the per-step hot path and reuse the result.
    Hard-codes OUT_DIM == 1 (matches the PyTorch module)."""
    p = jnp.zeros((P_ROWS, PAD_H), jnp.float32)
    p = p.at[:STATE_DIM, :HIDDEN_DIM].set(w1.astype(jnp.float32))
    p = p.at[_ROW_B1, :HIDDEN_DIM].set(b1.astype(jnp.float32))
    p = p.at[_ROW_W2, :HIDDEN_DIM].set(w2[:, 0].astype(jnp.float32))
    p = p.at[_ROW_B2, 0].set(b2.astype(jnp.float32)[0])
    return p


@jax.jit
def critic_forward(state, packed_params):
    """state: [B, STATE_DIM] (or [STATE_DIM]) f32; packed_params from prepare_params.

    Returns [B, 1] (or [1] for a single unbatched state), matching the PyTorch forward."""
    state = jnp.asarray(state, jnp.float32)
    squeeze = state.ndim == 1
    if squeeze:
        state = state[None, :]
    B = state.shape[0]

    # Minimal padding: multiple of 8 rows only.  Single grid step for typical batches;
    # split into 512-row blocks only for large training batches (v7x 2-TC sharing).
    b_pad = _round_up(max(B, 8), 8)
    if b_pad <= SINGLE_STEP_MAX:
        tb = b_pad
    else:
        tb = LARGE_TB
        b_pad = _round_up(b_pad, tb)

    if b_pad != B:
        x = jnp.zeros((b_pad, STATE_DIM), jnp.float32).at[:B, :].set(state)
    else:
        x = state

    out = pl.pallas_call(
        _critic_kernel,
        out_shape=jax.ShapeDtypeStruct((b_pad, OUT_DIM), jnp.float32),
        grid=(b_pad // tb,),
        in_specs=[
            pl.BlockSpec((tb, STATE_DIM), lambda i: (i, 0)),    # state tile per grid step
            pl.BlockSpec((P_ROWS, PAD_H), lambda i: (0, 0)),    # weights stay VMEM-resident
        ],
        out_specs=pl.BlockSpec((tb, OUT_DIM), lambda i: (i, 0)),  # narrow [tb, 1] output
        compiler_params=pltpu.CompilerParams(
            dimension_semantics=("parallel",)),
    )(x, packed_params)

    # Padded rows (>= B) hold relu(b1)·w2 + b2 garbage; the row slice removes them.
    if b_pad != B:
        out = out[:B]
    if squeeze:
        out = out[0]
    return out


def init_params(key):
    """Deterministic params mimicking nn.Linear default init (U(-1/sqrt(fan_in), +)).

    Stored as [in, out] (transposed relative to PyTorch's [out, in])."""
    k1, k2, k3, k4 = jax.random.split(key, 4)
    bound1 = 1.0 / jnp.sqrt(STATE_DIM)
    bound2 = 1.0 / jnp.sqrt(HIDDEN_DIM)
    w1 = jax.random.uniform(k1, (STATE_DIM, HIDDEN_DIM), jnp.float32, -bound1, bound1)
    b1 = jax.random.uniform(k2, (HIDDEN_DIM,), jnp.float32, -bound1, bound1)
    w2 = jax.random.uniform(k3, (HIDDEN_DIM, OUT_DIM), jnp.float32, -bound2, bound2)
    b2 = jax.random.uniform(k4, (OUT_DIM,), jnp.float32, -bound2, bound2)
    return w1, b1, w2, b2


if __name__ == "__main__":
    key = jax.random.PRNGKey(0)
    kp, kx, kx2 = jax.random.split(key, 3)
    w1, b1, w2, b2 = init_params(kp)
    packed = prepare_params(w1, b1, w2, b2)     # one-time packing, out of the hot path

    def ref_fn(s):
        h = jnp.maximum(
            jnp.dot(s, w1, precision=jax.lax.Precision.HIGHEST) + b1, 0.0)
        return jnp.dot(h, w2, precision=jax.lax.Precision.HIGHEST) + b2

    # Small batch (a couple of env states), matching the PyTorch usage: single grid step.
    state = jax.random.normal(kx, (2, STATE_DIM), jnp.float32)
    out = jax.block_until_ready(critic_forward(state, packed))
    assert out.shape == (2, OUT_DIM)
    assert jnp.allclose(out, ref_fn(state), atol=1e-5, rtol=1e-5)

    # Larger batch: pads only to 304 rows and still runs as a single grid step.
    state2 = jax.random.normal(kx2, (300, STATE_DIM), jnp.float32)
    out2 = jax.block_until_ready(critic_forward(state2, packed))
    assert out2.shape == (300, OUT_DIM)
    assert jnp.allclose(out2, ref_fn(state2), atol=1e-5, rtol=1e-5)

    # Single unbatched state (how the torch module is typically called in A3C rollouts).
    out3 = jax.block_until_ready(critic_forward(state[0], packed))
    assert out3.shape == (OUT_DIM,)
    assert jnp.allclose(out3, ref_fn(state[0:1])[0], atol=1e-5, rtol=1e-5)

    print("KERNEL_OK")
</pallas_src>

<mosaic_0001>
module attributes {stable_mosaic.version = 11 : i64} {
  func.func @_critic_kernel(%arg0: i32, %arg1: memref<8x2xf32, #tpu.memory_space<vmem>>, %arg2: memref<8x128xf32, #tpu.memory_space<vmem>>, %arg3: memref<8x1xf32, #tpu.memory_space<vmem>>) attributes {dimension_semantics = [#tpu.dimension_semantics<parallel>], iteration_bounds = array<i64: 1>, scalar_prefetch = 0 : i64, scratch_operands = 0 : i64, tpu.core_type = #tpu.core_type<tc>, window_params = [{transform_indices = @transform_0, window_bounds = array<i64: 8, 2>}, {pipeline_mode = #tpu.pipeline_mode<synchronous>, transform_indices = @transform_1, window_bounds = array<i64: 8, 128>}, {transform_indices = @transform_2, window_bounds = array<i64: 8, 1>}]} {
    %c0 = arith.constant 0 : index
    %c0_0 = arith.constant 0 : index
    %0 = vector.load %arg2[%c0, %c0_0] : memref<8x128xf32, #tpu.memory_space<vmem>>, vector<8x128xf32>
    %1 = vector.extract_strided_slice %0 {offsets = [2, 0], sizes = [1, 128], strides = [1, 1]} : vector<8x128xf32> to vector<1x128xf32>
    %c0_1 = arith.constant 0 : index
    %c0_2 = arith.constant 0 : index
    %2 = vector.load %arg1[%c0_1, %c0_2] : memref<8x2xf32, #tpu.memory_space<vmem>>, vector<8x1xf32>
    %3 = vector.extract_strided_slice %0 {offsets = [0, 0], sizes = [1, 128], strides = [1, 1]} : vector<8x128xf32> to vector<1x128xf32>
    %4 = vector.broadcast %2 : vector<8x1xf32> to vector<8x128xf32>
    %5 = vector.broadcast %3 : vector<1x128xf32> to vector<8x128xf32>
    %6 = arith.mulf %4, %5 : vector<8x128xf32>
    %7 = vector.broadcast %1 : vector<1x128xf32> to vector<8x128xf32>
    %8 = arith.addf %7, %6 : vector<8x128xf32>
    %c0_3 = arith.constant 0 : index
    %c1 = arith.constant 1 : index
    %9 = vector.load %arg1[%c0_3, %c1] : memref<8x2xf32, #tpu.memory_space<vmem>>, vector<8x1xf32>
    %10 = vector.extract_strided_slice %0 {offsets = [1, 0], sizes = [1, 128], strides = [1, 1]} : vector<8x128xf32> to vector<1x128xf32>
    %11 = vector.broadcast %9 : vector<8x1xf32> to vector<8x128xf32>
    %12 = vector.broadcast %10 : vector<1x128xf32> to vector<8x128xf32>
    %13 = arith.mulf %11, %12 : vector<8x128xf32>
    %14 = arith.addf %8, %13 : vector<8x128xf32>
    %cst = arith.constant 0.000000e+00 : f32
    %15 = vector.broadcast %cst : f32 to vector<8x128xf32>
    %16 = arith.maximumf %14, %15 : vector<8x128xf32>
    %17 = vector.extract_strided_slice %0 {offsets = [3, 0], sizes = [1, 128], strides = [1, 1]} : vector<8x128xf32> to vector<1x128xf32>
    %18 = vector.broadcast %17 : vector<1x128xf32> to vector<8x128xf32>
    %19 = arith.mulf %16, %18 : vector<8x128xf32>
    %cst_4 = arith.constant dense<0.000000e+00> : vector<8xf32>
    %20 = vector.multi_reduction <add>, %19, %cst_4 [1] : vector<8x128xf32> to vector<8xf32>
    %21 = vector.shape_cast %20 : vector<8xf32> to vector<8x1xf32>
    %22 = vector.extract_strided_slice %0 {offsets = [4, 0], sizes = [1, 1], strides = [1, 1]} : vector<8x128xf32> to vector<1x1xf32>
    %23 = vector.broadcast %22 : vector<1x1xf32> to vector<8x1xf32>
    %24 = arith.addf %21, %23 : vector<8x1xf32>
    %c0_5 = arith.constant 0 : index
    %c0_6 = arith.constant 0 : index
    %25 = vector.load %arg3[%c0_5, %c0_6] : memref<8x1xf32, #tpu.memory_space<vmem>>, vector<8x1xf32>
    tpu.vector_store %arg3[%c0_5, %c0_6], %24 {strides = array<i32>} : memref<8x1xf32, #tpu.memory_space<vmem>>, vector<8x1xf32>,
    return
  }
  func.func @transform_0(%arg0: i32) -> (i32, i32) {
    %c0_i32 = arith.constant 0 : i32
    %c0_i32_0 = arith.constant 0 : i32
    return %arg0, %c0_i32 : i32, i32
  }
  func.func @transform_1(%arg0: i32) -> (i32, i32) {
    %c0_i32 = arith.constant 0 : i32
    %c0_i32_0 = arith.constant 0 : i32
    %c0_i32_1 = arith.constant 0 : i32
    return %c0_i32, %c0_i32_0 : i32, i32
  }
  func.func @transform_2(%arg0: i32) -> (i32, i32) {
    %c0_i32 = arith.constant 0 : i32
    %c0_i32_0 = arith.constant 0 : i32
    return %arg0, %c0_i32 : i32, i32
  }
}

</mosaic_0001>

<llo_original>
// kernel: critic_forward.1
$region0: #{critic_forward.1}
  #allocation0 [shape = 'u32[]', space=smem, size = 0x4, offset = 0x4, fixed_abs, tag = 'smem constant byte address 0x4 - core index']
  #allocation1 [shape = 'u32[72,128]{1,0:T(1,128)}', space=vmem, size = 0x9000, scoped, tag = 'internal scratch']
  %s0 = inlined_call_operand.vmem [shape: f32[8,2], index: 0, kind: input, shape index: {}]
  %s1 = inlined_call_operand.vmem [shape: f32[8,128], index: 1, kind: input, shape index: {}]
  %s2 = inlined_call_operand.vmem [shape: f32[8,1], index: 2, kind: output, shape index: {}]
  %s3 = sld [smem:[#allocation0]]
  $region18: #{critic_forward.1} parent=0
    _
  %s5 = ssub.s32 1, %s3
  %s6 = scalar_select 0, %s5, %s3
  // Predicated region
  $region2: #{critic_forward.1} parent=0 // pred_check
    _
  $region3: #{critic_forward.1} parent=0 // pred_check_branch
    %8 = sbr.rel (0) target = $region5
  $region4: #{critic_forward.1} parent=0 // pred_region
    _
  $region5: #{critic_forward.1} parent=0 // pred_fallthru
    _
  // Predicated region
  $region6: #{critic_forward.1} parent=0 // pred_check
    _
  $region7: #{critic_forward.1} parent=0 // pred_check_branch
    %10 = sbr.rel (0) target = $region9
  $region8: #{critic_forward.1} parent=0 // pred_region
    _
  $region9: #{critic_forward.1} parent=0 // pred_fallthru
    _
  %v11 = vld [vmem:[%s1] sm:$0xff]
  %v12 = vld [vmem:[%s0] sm:$0xff]
  %14 = vset.pattern.permute.xlu0 0
  %15 = vperm.xlu0 %14, %v12
  %v16 = vpop.permute.xlu0 %15
  %v18 = vperm.slane %v11, 0
  %v19 = vmul.f32 %v16, %v18
  %v20 = vperm.slane %v11, 2
  %v21 = vadd.f32 %v20, %v19
  %22 = vset.pattern.permute.xlu0 1
  %23 = vperm.xlu0 %22, %v12
  %v24 = vpop.permute.xlu0 %23
  %v26 = vperm.slane %v11, 1
  %v27 = vmul.f32 %v24, %v26
  %v28 = vadd.f32 %v21, %v27
  %v29 = vmax.f32 %v28, 0.0
  %v30 = vperm.slane %v11, 3
  %v31 = vmul.f32 %v29, %v30
  %32 = vadd.xlane.f32.xlu0 %v31
  %v33 = vpop.xlane.xlu0 %32
  %v34 = vperm.slane %v11, 4
  %v35 = vadd.f32 %v33, %v34
  %vm36 = vcmask 7168
  %37 = vst.msk [vmem:[%s2] sm:$0xff] %vm36, %v35
  // Predicated region
  $region10: #{critic_forward.1} parent=0 // pred_check
    _
  $region11: #{critic_forward.1} parent=0 // pred_check_branch
    %39 = sbr.rel (0) target = $region13
  $region12: #{critic_forward.1} parent=0 // pred_region
    _
  $region13: #{critic_forward.1} parent=0 // pred_fallthru
    _
  // Predicated region
  $region14: #{critic_forward.1} parent=0 // pred_check
    _
  $region15: #{critic_forward.1} parent=0 // pred_check_branch
    %41 = sbr.rel (0) target = $region17
  $region16: #{critic_forward.1} parent=0 // pred_region
    _
  $region17: #{critic_forward.1} parent=0 // pred_fallthru
    _

</llo_original>
